<compile_context>
chip_gen: v7x
topology: tpu7x:2x2x1
jax: 0.10.0
libtpu: 0.0.40
codegen_flags: <defaults>
</compile_context>

<pallas_src>
import jax
import jax.numpy as jnp
from jax.experimental import pallas as pl
from jax.experimental.pallas import tpu as pltpu


_VMEM_TILE_BUDGET = 24 * 1024 * 1024   # conservative across v5e / v6e / v7x


def _round_up(x: int, m: int) -> int:
    return ((x + m - 1) // m) * m


# ---------------------------------------------------------------------------
# Kernel
# ---------------------------------------------------------------------------
def classifier_kernel(x_ref, w1_ref, b1_ref, g_ref, beta_ref, w2_ref, b2_ref,
                      out_ref):
    """Linear -> LayerNorm -> ReLU -> (Dropout=identity) -> Linear.

    One batch tile per grid step.  Feature dims (Hp, H2, Cp) are never tiled,
    so the LayerNorm reductions see the full 2H extent.
    """
    # Linear(H, 2H): bf16 MXU operands, f32 accumulation.  (astype is a no-op
    # if the producer already emits bf16 features.)
    x = x_ref[...].astype(jnp.bfloat16)
    h = jnp.dot(x, w1_ref[...], preferred_element_type=jnp.float32) + b1_ref[...]

    # LayerNorm(2H), eps = 1e-5 (matches nn.LayerNorm).  Centered two-pass
    # variance; rsqrt lands on the EUP slot.
    mean = jnp.mean(h, axis=-1, keepdims=True)
    hc = h - mean
    var = jnp.mean(hc * hc, axis=-1, keepdims=True)
    h = hc * jax.lax.rsqrt(var + 1e-5) * g_ref[...] + beta_ref[...]

    # ReLU; Dropout is identity (eval / deterministic semantics).
    h = jnp.maximum(h, 0.0)

    # Linear(2H, Cp): bf16 operands, f32 accumulation.  Cp is lane-dense
    # (multiple of 128); padded w2/b2 columns are zero.
    out = (jnp.dot(h.astype(jnp.bfloat16), w2_ref[...],
                   preferred_element_type=jnp.float32) + b2_ref[...])
    out_ref[...] = out.astype(out_ref.dtype)


# ---------------------------------------------------------------------------
# One-time parameter preparation (NOT part of the per-step forward path)
# ---------------------------------------------------------------------------
def prepare_classifier_params(w1, b1, gamma, beta, w2, b2):
    """One-time weight preprocessing.  Call once at model-load time: the bf16
    casts and lane-padding are standalone XLA ops that would otherwise add an
    HBM read+write of both weight matrices on every forward call.

    w1: [H, 2H]  (PyTorch nn.Linear weight, pre-transposed)
    b1/gamma/beta: [2H] or [1, 2H]
    w2: [2H, C]  (pre-transposed)       b2: [C] or [1, C]
    """
    w1 = jnp.asarray(w1, jnp.float32)
    w2 = jnp.asarray(w2, jnp.float32)
    H, H2 = w1.shape
    C = w2.shape[1]

    Hp = _round_up(H, 128)   # lane-dense K for the first matmul
    Cp = _round_up(C, 128)   # lane-dense output (unmasked vst)

    row = lambda v: jnp.asarray(v, jnp.float32).reshape(1, -1)
    return {
        "w1": jnp.pad(w1, ((0, Hp - H), (0, 0))).astype(jnp.bfloat16),
        "b1": row(b1),
        "gamma": row(gamma),
        "beta": row(beta),
        "w2": jnp.pad(w2, ((0, 0), (0, Cp - C))).astype(jnp.bfloat16),
        "b2": jnp.pad(row(b2), ((0, 0), (0, Cp - C))),
        "H": H,
        "C": C,
    }


# ---------------------------------------------------------------------------
# Tiling policy
# ---------------------------------------------------------------------------
def _derive_batch_tile(B, Hp, H2, Cp, x_itemsize, resident_bytes, tile_b_cap):
    """Pick the batch tile TB, padded batch extent Bp, and a VMEM limit.

    Per-tile VMEM: x double-buffered (pipelined over the grid) + f32 output
    double-buffered + f32 intermediates; resident weights are single-buffered
    (pl.Buffered(1)).  Tiny problems run as a single block: each grid step
    costs ~0.35 us overhead, which dominates when H/H2 are small.
    """
    Bp = _round_up(max(B, 1), 8)
    per_row = 2 * Hp * x_itemsize + 2 * Cp * 4 + 3 * H2 * 4
    vmem_rows = max((_VMEM_TILE_BUDGET - resident_bytes) // per_row, 8)
    tb = int(min(tile_b_cap, Bp, vmem_rows))

    # v7x has 2 TensorCores: once there is real work, keep >=2 blocks on the
    # "parallel" axis so both cores get a share.
    if Bp >= 256:
        tb = min(tb, _round_up(pl.cdiv(Bp, 2), 128))

    # MXU-friendly granularity (v6e/v7x MXU is 256-deep, v5e 128-deep).
    for g in (256, 128, 8):
        if tb >= g:
            tb = (tb // g) * g
            break
    tb = max(tb, 8)
    Bp = _round_up(Bp, tb)

    est_vmem = resident_bytes + tb * per_row
    vmem_limit = int(min(48 << 20, max(16 << 20, 2 * est_vmem)))
    return tb, Bp, vmem_limit


# ---------------------------------------------------------------------------
# Wrapper
# ---------------------------------------------------------------------------
def bioharmony_classifier(x, prepared, *, tile_b_cap=512):
    """Classifier head of BioHarmony as one tiled Pallas call.

    x:        [B, H] or [B, Hp] fused_representation (f32 or bf16)
    prepared: output of prepare_classifier_params (one-time)
    returns   [B, C] logits (float32)
    """
    Hp, H2 = prepared["w1"].shape
    Cp = prepared["w2"].shape[1]
    H, C = prepared["H"], prepared["C"]

    B = x.shape[0]
    if x.shape[1] not in (H, Hp):
        raise ValueError(f"x feature dim {x.shape[1]} != H={H} or Hp={Hp}")

    resident_bytes = (
        prepared["w1"].size * 2 + prepared["w2"].size * 2
        + (prepared["b1"].size + prepared["gamma"].size
           + prepared["beta"].size + prepared["b2"].size) * 4)

    TB, Bp, vmem_limit = _derive_batch_tile(
        B, Hp, H2, Cp, x.dtype.itemsize, resident_bytes, tile_b_cap)

    # Single activation pad (batch rows + lane-dense feature columns).
    # Ideally the upstream fusion emits Hp-wide (and bf16) features directly.
    pad_b, pad_h = Bp - B, Hp - x.shape[1]
    if pad_b or pad_h:
        x = jnp.pad(x, ((0, pad_b), (0, pad_h)))

    cost = pl.CostEstimate(
        flops=2 * Bp * Hp * H2 + 2 * Bp * H2 * Cp + 10 * Bp * H2,
        transcendentals=Bp,                         # one rsqrt per row
        bytes_accessed=(Bp * Hp * x.dtype.itemsize
                        + prepared["w1"].size * 2 + prepared["w2"].size * 2
                        + (prepared["b1"].size + prepared["gamma"].size
                           + prepared["beta"].size + prepared["b2"].size) * 4
                        + Bp * Cp * 4),
    )

    resident = dict(pipeline_mode=pl.Buffered(1))   # constant index_map blocks
    out = pl.pallas_call(
        classifier_kernel,
        out_shape=jax.ShapeDtypeStruct((Bp, Cp), jnp.float32),
        grid=(Bp // TB,),
        in_specs=[
            pl.BlockSpec((TB, Hp), lambda i: (i, 0)),               # x (tiled)
            pl.BlockSpec((Hp, H2), lambda i: (0, 0), **resident),   # w1
            pl.BlockSpec((1, H2), lambda i: (0, 0), **resident),    # b1
            pl.BlockSpec((1, H2), lambda i: (0, 0), **resident),    # gamma
            pl.BlockSpec((1, H2), lambda i: (0, 0), **resident),    # beta
            pl.BlockSpec((H2, Cp), lambda i: (0, 0), **resident),   # w2
            pl.BlockSpec((1, Cp), lambda i: (0, 0), **resident),    # b2
        ],
        out_specs=pl.BlockSpec((TB, Cp), lambda i: (i, 0)),
        compiler_params=pltpu.CompilerParams(
            dimension_semantics=("parallel",),
            vmem_limit_bytes=vmem_limit),
        cost_estimate=cost,
    )(x, prepared["w1"], prepared["b1"], prepared["gamma"],
      prepared["beta"], prepared["w2"], prepared["b2"])

    return out[:B, :C]


def bioharmony_forward(batch, prepared_params):
    """Standard (non-ModaEquil) path of BioHarmony.forward, reduced to the
    well-defined compute: logits = classifier(fused_representation)."""
    results = {}
    x = batch["fused_representation"]
    results["fused_representation"] = x
    results["logits"] = bioharmony_classifier(x, prepared_params)
    return results


# ---------------------------------------------------------------------------
# Pure-JAX reference (same bf16-operand / f32-accum convention)
# ---------------------------------------------------------------------------
def _reference_classifier(x, w1, b1, gamma, beta, w2, b2):
    h = jnp.dot(x.astype(jnp.bfloat16), w1.astype(jnp.bfloat16),
                preferred_element_type=jnp.float32) + b1.reshape(1, -1)
    mean = jnp.mean(h, axis=-1, keepdims=True)
    var = jnp.mean((h - mean) ** 2, axis=-1, keepdims=True)
    h = ((h - mean) * jax.lax.rsqrt(var + 1e-5) * gamma.reshape(1, -1)
         + beta.reshape(1, -1))
    h = jnp.maximum(h, 0.0)
    return jnp.dot(h.astype(jnp.bfloat16), w2.astype(jnp.bfloat16),
                   preferred_element_type=jnp.float32) + b2.reshape(1, -1)


if __name__ == "__main__":
    def run_case(key, batch_size, hidden_dim, num_classes):
        h2 = hidden_dim * 2
        kx, kw1, kb1, kw2, kb2 = jax.random.split(key, 5)
        s1 = 1.0 / float(jnp.sqrt(hidden_dim))
        s2 = 1.0 / float(jnp.sqrt(h2))
        # PyTorch Linear weight is [out, in]; stored transposed as [in, out].
        raw = {
            "w1": jax.random.uniform(kw1, (hidden_dim, h2), jnp.float32, -s1, s1),
            "b1": jax.random.uniform(kb1, (h2,), jnp.float32, -s1, s1),
            "gamma": jnp.ones((h2,), jnp.float32),     # LayerNorm weight
            "beta": jnp.zeros((h2,), jnp.float32),     # LayerNorm bias
            "w2": jax.random.uniform(kw2, (h2, num_classes), jnp.float32, -s2, s2),
            "b2": jax.random.uniform(kb2, (num_classes,), jnp.float32, -s2, s2),
        }
        # One-time preparation, outside the forward path.
        prepared = prepare_classifier_params(**raw)
        batch = {
            "fused_representation": jax.random.normal(
                kx, (batch_size, hidden_dim), jnp.float32),
            "labels": jnp.zeros((batch_size,), jnp.int32),
        }
        out = bioharmony_forward(batch, prepared)
        logits = jax.block_until_ready(out["logits"])
        assert logits.shape == (batch_size, num_classes)
        assert bool(jnp.all(jnp.isfinite(logits)))
        ref = _reference_classifier(batch["fused_representation"], **raw)
        assert jnp.allclose(logits, ref, atol=5e-2, rtol=5e-2), (
            "Pallas logits deviate from reference")

    key = jax.random.PRNGKey(0)
    k1, k2 = jax.random.split(key)
    # Module's actual tiny config -> single-block fast path (grid=(1,)).
    run_case(k1, batch_size=8, hidden_dim=32, num_classes=10)
    # Larger batch -> multi-tile "parallel" grid with single-buffered weights.
    run_case(k2, batch_size=512, hidden_dim=64, num_classes=10)

    print("KERNEL_OK")
</pallas_src>

<mosaic_0001>
module attributes {stable_mosaic.version = 11 : i64} {
  func.func @classifier_kernel(%arg0: i32, %arg1: memref<8x128xf32, #tpu.memory_space<vmem>>, %arg2: memref<128x64xbf16, #tpu.memory_space<vmem>>, %arg3: memref<1x64xf32, #tpu.memory_space<vmem>>, %arg4: memref<1x64xf32, #tpu.memory_space<vmem>>, %arg5: memref<1x64xf32, #tpu.memory_space<vmem>>, %arg6: memref<64x128xbf16, #tpu.memory_space<vmem>>, %arg7: memref<1x128xf32, #tpu.memory_space<vmem>>, %arg8: memref<8x128xf32, #tpu.memory_space<vmem>>) attributes {dimension_semantics = [#tpu.dimension_semantics<parallel>], iteration_bounds = array<i64: 1>, scalar_prefetch = 0 : i64, scratch_operands = 0 : i64, tpu.core_type = #tpu.core_type<tc>, window_params = [{transform_indices = @transform_0, window_bounds = array<i64: 8, 128>}, {pipeline_mode = #tpu.pipeline_mode<synchronous>, transform_indices = @transform_1, window_bounds = array<i64: 128, 64>}, {pipeline_mode = #tpu.pipeline_mode<synchronous>, transform_indices = @transform_2, window_bounds = array<i64: 1, 64>}, {pipeline_mode = #tpu.pipeline_mode<synchronous>, transform_indices = @transform_3, window_bounds = array<i64: 1, 64>}, {pipeline_mode = #tpu.pipeline_mode<synchronous>, transform_indices = @transform_4, window_bounds = array<i64: 1, 64>}, {pipeline_mode = #tpu.pipeline_mode<synchronous>, transform_indices = @transform_5, window_bounds = array<i64: 64, 128>}, {pipeline_mode = #tpu.pipeline_mode<synchronous>, transform_indices = @transform_6, window_bounds = array<i64: 1, 128>}, {transform_indices = @transform_7, window_bounds = array<i64: 8, 128>}]} {
    %c0 = arith.constant 0 : index
    %c0_0 = arith.constant 0 : index
    %0 = vector.load %arg1[%c0, %c0_0] : memref<8x128xf32, #tpu.memory_space<vmem>>, vector<8x128xf32>
    %1 = arith.truncf %0 : vector<8x128xf32> to vector<8x128xbf16>
    %c0_1 = arith.constant 0 : index
    %c0_2 = arith.constant 0 : index
    %2 = vector.load %arg2[%c0_1, %c0_2] : memref<128x64xbf16, #tpu.memory_space<vmem>>, vector<128x64xbf16>
    %cst = arith.constant dense<0.000000e+00> : vector<8x64xf32>
    %3 = tpu.matmul %1, %2, %cst {dimension_numbers = #tpu.dot_dimension_numbers<[1], [0], [0], [1], [0, 0, 1, 1], [], []>} : vector<8x128xbf16>, vector<128x64xbf16>, vector<8x64xf32> -> vector<8x64xf32>
    %c0_3 = arith.constant 0 : index
    %c0_4 = arith.constant 0 : index
    %4 = vector.load %arg3[%c0_3, %c0_4] : memref<1x64xf32, #tpu.memory_space<vmem>>, vector<1x64xf32>
    %5 = vector.broadcast %4 : vector<1x64xf32> to vector<8x64xf32>
    %6 = arith.addf %3, %5 : vector<8x64xf32>
    %cst_5 = arith.constant dense<0.000000e+00> : vector<8xf32>
    %7 = vector.multi_reduction <add>, %6, %cst_5 [1] : vector<8x64xf32> to vector<8xf32>
    %8 = vector.shape_cast %7 : vector<8xf32> to vector<8x1xf32>
    %cst_6 = arith.constant 6.400000e+01 : f32
    %9 = vector.broadcast %cst_6 : f32 to vector<8x1xf32>
    %10 = arith.divf %8, %9 : vector<8x1xf32>
    %11 = vector.broadcast %10 : vector<8x1xf32> to vector<8x64xf32>
    %12 = arith.subf %6, %11 : vector<8x64xf32>
    %13 = arith.mulf %12, %12 : vector<8x64xf32>
    %cst_7 = arith.constant dense<0.000000e+00> : vector<8xf32>
    %14 = vector.multi_reduction <add>, %13, %cst_7 [1] : vector<8x64xf32> to vector<8xf32>
    %15 = vector.shape_cast %14 : vector<8xf32> to vector<8x1xf32>
    %cst_8 = arith.constant 6.400000e+01 : f32
    %16 = vector.broadcast %cst_8 : f32 to vector<8x1xf32>
    %17 = arith.divf %15, %16 : vector<8x1xf32>
    %cst_9 = arith.constant 9.99999974E-6 : f32
    %18 = vector.broadcast %cst_9 : f32 to vector<8x1xf32>
    %19 = arith.addf %17, %18 : vector<8x1xf32>
    %20 = math.rsqrt %19 : vector<8x1xf32>
    %21 = vector.broadcast %20 : vector<8x1xf32> to vector<8x64xf32>
    %22 = arith.mulf %12, %21 : vector<8x64xf32>
    %c0_10 = arith.constant 0 : index
    %c0_11 = arith.constant 0 : index
    %23 = vector.load %arg4[%c0_10, %c0_11] : memref<1x64xf32, #tpu.memory_space<vmem>>, vector<1x64xf32>
    %24 = vector.broadcast %23 : vector<1x64xf32> to vector<8x64xf32>
    %25 = arith.mulf %22, %24 : vector<8x64xf32>
    %c0_12 = arith.constant 0 : index
    %c0_13 = arith.constant 0 : index
    %26 = vector.load %arg5[%c0_12, %c0_13] : memref<1x64xf32, #tpu.memory_space<vmem>>, vector<1x64xf32>
    %27 = vector.broadcast %26 : vector<1x64xf32> to vector<8x64xf32>
    %28 = arith.addf %25, %27 : vector<8x64xf32>
    %cst_14 = arith.constant 0.000000e+00 : f32
    %29 = vector.broadcast %cst_14 : f32 to vector<8x64xf32>
    %30 = arith.maximumf %28, %29 : vector<8x64xf32>
    %31 = arith.truncf %30 : vector<8x64xf32> to vector<8x64xbf16>
    %c0_15 = arith.constant 0 : index
    %c0_16 = arith.constant 0 : index
    %32 = vector.load %arg6[%c0_15, %c0_16] : memref<64x128xbf16, #tpu.memory_space<vmem>>, vector<64x128xbf16>
    %cst_17 = arith.constant dense<0.000000e+00> : vector<8x128xf32>
    %33 = tpu.matmul %31, %32, %cst_17 {dimension_numbers = #tpu.dot_dimension_numbers<[1], [0], [0], [1], [0, 0, 1, 1], [], []>} : vector<8x64xbf16>, vector<64x128xbf16>, vector<8x128xf32> -> vector<8x128xf32>
    %c0_18 = arith.constant 0 : index
    %c0_19 = arith.constant 0 : index
    %34 = vector.load %arg7[%c0_18, %c0_19] : memref<1x128xf32, #tpu.memory_space<vmem>>, vector<1x128xf32>
    %35 = vector.broadcast %34 : vector<1x128xf32> to vector<8x128xf32>
    %36 = arith.addf %33, %35 : vector<8x128xf32>
    %c0_20 = arith.constant 0 : index
    %c0_21 = arith.constant 0 : index
    %37 = vector.load %arg8[%c0_20, %c0_21] : memref<8x128xf32, #tpu.memory_space<vmem>>, vector<8x128xf32>
    tpu.vector_store %arg8[%c0_20, %c0_21], %36 {strides = array<i32>} : memref<8x128xf32, #tpu.memory_space<vmem>>, vector<8x128xf32>,
    return
  }
  func.func @transform_0(%arg0: i32) -> (i32, i32) {
    %c0_i32 = arith.constant 0 : i32
    %c0_i32_0 = arith.constant 0 : i32
    return %arg0, %c0_i32 : i32, i32
  }
  func.func @transform_1(%arg0: i32) -> (i32, i32) {
    %c0_i32 = arith.constant 0 : i32
    %c0_i32_0 = arith.constant 0 : i32
    %c0_i32_1 = arith.constant 0 : i32
    return %c0_i32, %c0_i32_0 : i32, i32
  }
  func.func @transform_2(%arg0: i32) -> (i32, i32) {
    %c0_i32 = arith.constant 0 : i32
    %c0_i32_0 = arith.constant 0 : i32
    %c0_i32_1 = arith.constant 0 : i32
    return %c0_i32, %c0_i32_0 : i32, i32
  }
  func.func @transform_3(%arg0: i32) -> (i32, i32) {
    %c0_i32 = arith.constant 0 : i32
    %c0_i32_0 = arith.constant 0 : i32
    %c0_i32_1 = arith.constant 0 : i32
    return %c0_i32, %c0_i32_0 : i32, i32
  }
  func.func @transform_4(%arg0: i32) -> (i32, i32) {
    %c0_i32 = arith.constant 0 : i32
    %c0_i32_0 = arith.constant 0 : i32
    %c0_i32_1 = arith.constant 0 : i32
    return %c0_i32, %c0_i32_0 : i32, i32
  }
  func.func @transform_5(%arg0: i32) -> (i32, i32) {
    %c0_i32 = arith.constant 0 : i32
    %c0_i32_0 = arith.constant 0 : i32
    %c0_i32_1 = arith.constant 0 : i32
    return %c0_i32, %c0_i32_0 : i32, i32
  }
  func.func @transform_6(%arg0: i32) -> (i32, i32) {
    %c0_i32 = arith.constant 0 : i32
    %c0_i32_0 = arith.constant 0 : i32
    %c0_i32_1 = arith.constant 0 : i32
    return %c0_i32, %c0_i32_0 : i32, i32
  }
  func.func @transform_7(%arg0: i32) -> (i32, i32) {
    %c0_i32 = arith.constant 0 : i32
    %c0_i32_0 = arith.constant 0 : i32
    return %arg0, %c0_i32 : i32, i32
  }
}

</mosaic_0001>

<llo_original>
// kernel: tpu_custom_call.1
$region0: #{tpu_custom_call.1}
  #allocation0 [shape = 'u32[]', space=smem, size = 0x4, offset = 0x4, fixed_abs, tag = 'smem constant byte address 0x4 - core index']
  #allocation1 [shape = 'u32[144,128]{1,0:T(1,128)}', space=vmem, size = 0x12000, scoped, tag = 'internal scratch']
  %s0 = inlined_call_operand.vmem [shape: f32[8,128], index: 0, kind: input, shape index: {}]
  %s1 = inlined_call_operand.vmem [shape: bf16[128,64], index: 1, kind: input, shape index: {}]
  %s2 = inlined_call_operand.vmem [shape: f32[1,64], index: 2, kind: input, shape index: {}]
  %s3 = inlined_call_operand.vmem [shape: f32[1,64], index: 3, kind: input, shape index: {}]
  %s4 = inlined_call_operand.vmem [shape: f32[1,64], index: 4, kind: input, shape index: {}]
  %s5 = inlined_call_operand.vmem [shape: bf16[64,128], index: 5, kind: input, shape index: {}]
  %s6 = inlined_call_operand.vmem [shape: f32[1,128], index: 6, kind: input, shape index: {}]
  %s7 = inlined_call_operand.hbm [shape: f32[8,128], index: 7, kind: output, shape index: {}]
  %s8 = sld [smem:[#allocation0]]
  $region38: #{tpu_custom_call.1} parent=0
    _
  %s10 = ssub.s32 1, %s8
  %s11 = scalar_select 0, %s10, %s8
  $region1: #{tpu_custom_call.1} parent=0
    #allocation2 [shape = 'u8[4096]{0}', space=vmem, size = 0x1000, scoped, tag = 'output window, operand 0, single buffered']
    #allocation3 [shape = 's32[1]{0}', space=sflag, size = 0x4, scoped, tag = 'scoped memory for tpu_custom_call.1']
    %12 = vsyncpa [#allocation3], 0
    // Predicated region
    $region2: #{tpu_custom_call.1} parent=1 // pred_check
      _
    $region3: #{tpu_custom_call.1} parent=1 // pred_check_branch
      %14 = sbr.rel (0) target = $region5
    $region4: #{tpu_custom_call.1} parent=1 // pred_region
      _
    $region5: #{tpu_custom_call.1} parent=1 // pred_fallthru
      _
    // Predicated region
    $region6: #{tpu_custom_call.1} parent=1 // pred_check
      _
    $region7: #{tpu_custom_call.1} parent=1 // pred_check_branch
      %16 = sbr.rel (0) target = $region9
    $region8: #{tpu_custom_call.1} parent=1 // pred_region
      _
    $region9: #{tpu_custom_call.1} parent=1 // pred_fallthru
      _
    // Predicated region
    $region10: #{tpu_custom_call.1} parent=1 // pred_check
      _
    $region11: #{tpu_custom_call.1} parent=1 // pred_check_branch
      %18 = sbr.rel (0) target = $region13
    $region12: #{tpu_custom_call.1} parent=1 // pred_region
      _
    $region13: #{tpu_custom_call.1} parent=1 // pred_fallthru
      _
    // Predicated region
    $region14: #{tpu_custom_call.1} parent=1 // pred_check
      _
    $region15: #{tpu_custom_call.1} parent=1 // pred_check_branch
      %20 = sbr.rel (0) target = $region17
    $region16: #{tpu_custom_call.1} parent=1 // pred_region
      _
    $region17: #{tpu_custom_call.1} parent=1 // pred_fallthru
      _
    // Predicated region
    $region18: #{tpu_custom_call.1} parent=1 // pred_check
      _
    $region19: #{tpu_custom_call.1} parent=1 // pred_check_branch
      %22 = sbr.rel (0) target = $region21
    $region20: #{tpu_custom_call.1} parent=1 // pred_region
      _
    $region21: #{tpu_custom_call.1} parent=1 // pred_fallthru
      _
    // Predicated region
    $region22: #{tpu_custom_call.1} parent=1 // pred_check
      _
    $region23: #{tpu_custom_call.1} parent=1 // pred_check_branch
      %24 = sbr.rel (0) target = $region25
    $region24: #{tpu_custom_call.1} parent=1 // pred_region
      _
    $region25: #{tpu_custom_call.1} parent=1 // pred_fallthru
      _
    // Predicated region
    $region26: #{tpu_custom_call.1} parent=1 // pred_check
      _
    $region27: #{tpu_custom_call.1} parent=1 // pred_check_branch
      %26 = sbr.rel (0) target = $region29
    $region28: #{tpu_custom_call.1} parent=1 // pred_region
      _
    $region29: #{tpu_custom_call.1} parent=1 // pred_fallthru
      _
    %v28 = vld [vmem:[%s0] sm:$0xff]
    %v29 = vpack.c.bf16 %v28, %v28
    %v30 = vld [vmem:[%s1] sm:$0xf]
    %v31 = vld [vmem:[%s1 + $0x4] sm:$0xf]
    %v32 = vld [vmem:[%s1 + $0x8] sm:$0xf]
    %v33 = vld [vmem:[%s1 + $0xc] sm:$0xf]
    %v34 = vld [vmem:[%s1 + $0x10] sm:$0xf]
    %v35 = vld [vmem:[%s1 + $0x14] sm:$0xf]
    %v36 = vld [vmem:[%s1 + $0x18] sm:$0xf]
    %v37 = vld [vmem:[%s1 + $0x1c] sm:$0xf]
    %v38 = vld [vmem:[%s1 + $0x20] sm:$0xf]
    %v39 = vld [vmem:[%s1 + $0x24] sm:$0xf]
    %v40 = vld [vmem:[%s1 + $0x28] sm:$0xf]
    %v41 = vld [vmem:[%s1 + $0x2c] sm:$0xf]
    %v42 = vld [vmem:[%s1 + $0x30] sm:$0xf]
    %v43 = vld [vmem:[%s1 + $0x34] sm:$0xf]
    %v44 = vld [vmem:[%s1 + $0x38] sm:$0xf]
    %v45 = vld [vmem:[%s1 + $0x3c] sm:$0xf]
    %v46 = vld [vmem:[%s2] sm:$0x1]
    %v48 = vlaneseq
    %v49 = vshrl.u32 %v48, 7
    %v50 = vsub.s32 0, %v49
    %v51 = vrot.slane %v46, %v50
    %v69 = vunpack.c.l.b16 %v30
    %v70 = vunpack.c.l.b16 %v31
    %v71 = vunpack.c.l.b16 %v32
    %v72 = vunpack.c.l.b16 %v33
    %v73 = vunpack.c.l.b16 %v34
    %v74 = vunpack.c.l.b16 %v35
    %v75 = vunpack.c.l.b16 %v36
    %v76 = vunpack.c.l.b16 %v37
    %v77 = vunpack.c.l.b16 %v38
    %v78 = vunpack.c.l.b16 %v39
    %v79 = vunpack.c.l.b16 %v40
    %v80 = vunpack.c.l.b16 %v41
    %v81 = vunpack.c.l.b16 %v42
    %v82 = vunpack.c.l.b16 %v43
    %v83 = vunpack.c.l.b16 %v44
    %v84 = vunpack.c.l.b16 %v45
    %v85 = vpack.c.b16 %v70, %v69
    %v86 = vpack.c.b16 %v72, %v71
    %v87 = vpack.c.b16 %v74, %v73
    %v88 = vpack.c.b16 %v76, %v75
    %v89 = vpack.c.b16 %v78, %v77
    %v90 = vpack.c.b16 %v80, %v79
    %v91 = vpack.c.b16 %v82, %v81
    %v92 = vpack.c.b16 %v84, %v83
    %101 = vmatprep.subr.bf16.mxu0 0
    %102 = vmatpush1.bf16.msra.mxu0 %v85
    %103 = vmatprep.subr.bf16.mxu0 0
    %104 = vmatpush1.bf16.msra.mxu0 %v86
    %105 = vmatprep.subr.bf16.mxu0 0
    %106 = vmatpush1.bf16.msra.mxu0 %v87
    %107 = vmatprep.subr.bf16.mxu0 0
    %108 = vmatpush1.bf16.msra.mxu0 %v88
    %109 = vmatprep.subr.bf16.mxu0 0
    %110 = vmatpush1.bf16.msra.mxu0 %v89
    %111 = vmatprep.subr.bf16.mxu0 0
    %112 = vmatpush1.bf16.msra.mxu0 %v90
    %113 = vmatprep.subr.bf16.mxu0 0
    %114 = vmatpush1.bf16.msra.mxu0 %v91
    %115 = vmatprep.subr.bf16.mxu0 0
    %116 = vmatpush1.bf16.msra.mxu0 %v92
    %117 = vmatprep.subr.bf16.mxu0 0
    %118 = vmatpush1.bf16.msra.mxu0 0
    %119 = vmatprep.subr.bf16.mxu0 0
    %120 = vmatpush1.bf16.msra.mxu0 0
    %121 = vmatprep.subr.bf16.mxu0 0
    %122 = vmatpush1.bf16.msra.mxu0 0
    %123 = vmatprep.subr.bf16.mxu0 0
    %124 = vmatpush1.bf16.msra.mxu0 0
    %125 = vmatprep.subr.bf16.mxu0 0
    %126 = vmatpush1.bf16.msra.mxu0 0
    %127 = vmatprep.subr.bf16.mxu0 0
    %128 = vmatpush1.bf16.msra.mxu0 0
    %129 = vmatprep.subr.bf16.mxu0 0
    %130 = vmatpush1.bf16.msra.mxu0 0
    %131 = vmatprep.subr.bf16.mxu0 0
    %132 = vmatpush1.bf16.msra.mxu0 0
    %133 = vmatprep.mubr.bf16.mxu0 0
    %134 = vmatmul.mubr.bf16.gmra.mrb[0].mxu0 %v29
    %v135 = vpop.f32.mrb[0].mxu0
    %v136 = vadd.f32 %v51, %v135
    %v137 = vpop.f32.mrb[0].mxu0
    %v138 = vpop.f32.mrb[0].mxu0
    %v139 = vpop.f32.mrb[0].mxu0
    %140 = vdwg.mxu0
    %vm141 = vcmask 523264
    %v142 = vsel %vm141, %v136, 0.0
    %143 = vadd.xlane.f32.xlu0 %v142
    %v144 = vpop.xlane.xlu0 %143
    %v145 = vrcp.pop 64.0
    %v146 = vmul.f32 %v144, %v145
    %v147 = vsub.f32 %v136, %v146
    %v148 = vmul.f32 %v147, %v147
    %v149 = vsel %vm141, %v148, 0.0
    %150 = vadd.xlane.f32.xlu0 %v149
    %v151 = vpop.xlane.xlu0 %150
    %v152 = vmul.f32 %v151, %v145
    %v153 = vadd.f32 %v152, 1e-05
    %v154 = vrsqrt.pop %v153
    %v155 = vmul.f32 %v147, %v154
    %v156 = vld [vmem:[%s3] sm:$0x1]
    %v158 = vlaneseq
    %v159 = vshrl.u32 %v158, 7
    %v160 = vsub.s32 0, %v159
    %v161 = vrot.slane %v156, %v160
    %v163 = vmul.f32 %v155, %v161
    %v164 = vld [vmem:[%s4] sm:$0x1]
    %v166 = vlaneseq
    %v167 = vshrl.u32 %v166, 7
    %v168 = vsub.s32 0, %v167
    %v169 = vrot.slane %v164, %v168
    %v171 = vadd.f32 %v163, %v169
    %v172 = vmax.f32 %v171, 0.0
    %v173 = vpack.c.bf16 %v172, %v172
    %v174 = vld [vmem:[%s5] sm:$0xf]
    %v175 = vld [vmem:[%s5 + $0x4] sm:$0xf]
    %v176 = vld [vmem:[%s5 + $0x8] sm:$0xf]
    %v177 = vld [vmem:[%s5 + $0xc] sm:$0xf]
    %v178 = vld [vmem:[%s5 + $0x10] sm:$0xf]
    %v179 = vld [vmem:[%s5 + $0x14] sm:$0xf]
    %v180 = vld [vmem:[%s5 + $0x18] sm:$0xf]
    %v181 = vld [vmem:[%s5 + $0x1c] sm:$0xf]
    %v182 = vld [vmem:[%s6] sm:$0x1]
    %v184 = vlaneseq
    %v185 = vshrl.u32 %v184, 7
    %v186 = vsub.s32 0, %v185
    %v187 = vrot.slane %v182, %v186
    %v197 = vunpack.c.l.b16 %v174
    %v198 = vunpack.c.l.b16 %v175
    %v199 = vunpack.c.l.b16 %v176
    %v200 = vunpack.c.l.b16 %v177
    %v201 = vunpack.c.l.b16 %v178
    %v202 = vunpack.c.l.b16 %v179
    %v203 = vunpack.c.l.b16 %v180
    %v204 = vunpack.c.l.b16 %v181
    %v205 = vpack.c.b16 %v198, %v197
    %v206 = vpack.c.b16 %v200, %v199
    %v207 = vpack.c.b16 %v202, %v201
    %v208 = vpack.c.b16 %v204, %v203
    %v214 = vsel %vm141, %v173, 0
    %216 = vmatprep.subr.bf16.mxu0 0
    %217 = vmatpush1.bf16.msra.mxu0 %v205
    %218 = vmatprep.subr.bf16.mxu0 0
    %219 = vmatpush1.bf16.msra.mxu0 %v206
    %220 = vmatprep.subr.bf16.mxu0 0
    %221 = vmatpush1.bf16.msra.mxu0 %v207
    %222 = vmatprep.subr.bf16.mxu0 0
    %223 = vmatpush1.bf16.msra.mxu0 %v208
    %224 = vmatprep.subr.bf16.mxu0 0
    %225 = vmatpush1.bf16.msra.mxu0 0
    %226 = vmatprep.subr.bf16.mxu0 0
    %227 = vmatpush1.bf16.msra.mxu0 0
    %228 = vmatprep.subr.bf16.mxu0 0
    %229 = vmatpush1.bf16.msra.mxu0 0
    %230 = vmatprep.subr.bf16.mxu0 0
    %231 = vmatpush1.bf16.msra.mxu0 0
    %232 = vmatprep.subr.bf16.mxu0 0
    %233 = vmatpush1.bf16.msra.mxu0 0
    %234 = vmatprep.subr.bf16.mxu0 0
    %235 = vmatpush1.bf16.msra.mxu0 0
    %236 = vmatprep.subr.bf16.mxu0 0
    %237 = vmatpush1.bf16.msra.mxu0 0
    %238 = vmatprep.subr.bf16.mxu0 0
    %239 = vmatpush1.bf16.msra.mxu0 0
    %240 = vmatprep.subr.bf16.mxu0 0
    %241 = vmatpush1.bf16.msra.mxu0 0
    %242 = vmatprep.subr.bf16.mxu0 0
    %243 = vmatpush1.bf16.msra.mxu0 0
    %244 = vmatprep.subr.bf16.mxu0 0
    %245 = vmatpush1.bf16.msra.mxu0 0
    %246 = vmatprep.subr.bf16.mxu0 0
    %247 = vmatpush1.bf16.msra.mxu0 0
    %248 = vmatprep.mubr.bf16.mxu0 0
    %249 = vmatmul.mubr.bf16.gmra.mrb[0].mxu0 %v214
    %v250 = vpop.f32.mrb[0].mxu0
    %v251 = vadd.f32 %v187, %v250
    %v252 = vpop.f32.mrb[0].mxu0
    %v253 = vpop.f32.mrb[0].mxu0
    %v254 = vpop.f32.mrb[0].mxu0
    %255 = vdwg.mxu0
    %256 = vst [vmem:[#allocation2] sm:$0xff] %v251
    // Predicated region
    $region30: #{tpu_custom_call.1} parent=1 // pred_check
      _
    $region31: #{tpu_custom_call.1} parent=1 // pred_check_branch
      %258 = sbr.rel (0) target = $region33
    $region32: #{tpu_custom_call.1} parent=1 // pred_region
      %s260 = ssub.s32 128, 128
      %261 = vsyncadd [#allocation3], %s260
      %s263 = sshll.u32 [#allocation2], 4
      %s264 = int_to_ptr.vmem [resolvable:$true] %s263
      %266 = dma.vmem_to_hbm [thread:$0]  %s264, 128, %s7, [#allocation3]
    $region33: #{tpu_custom_call.1} parent=1 // pred_fallthru
      _
    // Predicated region
    $region34: #{tpu_custom_call.1} parent=1 // pred_check
      _
    $region35: #{tpu_custom_call.1} parent=1 // pred_check_branch
      %268 = sbr.rel (0) target = $region37
    $region36: #{tpu_custom_call.1} parent=1 // pred_region
      %269 = dma.done [#allocation3], 128
    $region37: #{tpu_custom_call.1} parent=1 // pred_fallthru
      _
    %270 = vsyncpa [#allocation3], 1

</llo_original>
